<compile_context>
chip_gen: v7x
topology: tpu7x:2x2x1
jax: 0.10.0
libtpu: 0.0.40
codegen_flags: <defaults>
</compile_context>

<pallas_src>
import functools

import jax
import jax.numpy as jnp
from jax.experimental import pallas as pl
from jax.experimental.pallas import tpu as pltpu

n_embd = 128          # C (fixed by the module)
block_size = 128      # max T supported by the causal mask


# ----------------------------- device-kind helpers -----------------------------

def _device_kind():
    try:
        return (jax.devices()[0].device_kind or "").lower()
    except Exception:
        return ""


def _has_multiple_tensorcores():
    """v7x exposes 2 TensorCores per chip; v5e/v6e have a single TC."""
    kind = _device_kind()
    return ("v7" in kind) or ("7x" in kind)


def _is_v5e():
    kind = _device_kind()
    return ("v5e" in kind) or ("v5 lite" in kind) or ("v5lite" in kind)


def _choose_block_b(B, *, prefer_split, max_bb=32):
    """Largest divisor of B that is <= max_bb.

    prefer_split=True (v7x) keeps >=2 grid steps so the batch axis can shard
    across both TensorCores; on single-TC chips we take grid=1 when possible
    (extra steps are pure pipeline overhead there).
    """
    divisors = [d for d in range(1, B + 1) if B % d == 0 and d <= max_bb]
    if not divisors:
        divisors = [1]
    if prefer_split:
        split = [d for d in divisors if B // d >= 2]
        if split:
            return max(split)
    return max(divisors)


# ---------------------------------- kernel -------------------------------------

def _head_kernel(x_ref, w_ref, o_ref, *, head_size, compute_dtype, exp_dtype,
                 approx_recip):
    # x_ref: (Bb, T, C)      block of batch elements
    # w_ref: (C, Npad)       fused projection weights, layout [v | k | q | 0-pad]
    #                        (query columns pre-scaled by 1/sqrt(C))
    # o_ref: (Bb, T, Npad)   lane-dense padded output; columns [0, H) hold wei @ v
    Bb, T, C = x_ref.shape
    H = head_size
    Npad = w_ref.shape[1]

    # ---- fused, padded QKV projection: one (Bb*T, C) @ (C, Npad) MXU matmul ----
    x2d = x_ref[...].reshape(Bb * T, C).astype(compute_dtype)
    kqv = jnp.dot(x2d, w_ref[...], preferred_element_type=jnp.float32)
    kqv = kqv.reshape(Bb, T, Npad).astype(compute_dtype)      # [v | k | q | 0]

    k = kqv[:, :, H:2 * H]                                    # (Bb, T, H)
    q = kqv[:, :, 2 * H:3 * H]                                # scale already folded in

    # ---- attention scores: batched contraction over H (no explicit transpose) ----
    wei = jnp.einsum("bqh,bkh->bqk", q, k,
                     preferred_element_type=jnp.float32)      # (Bb, T, T) f32

    # ---- causal mask: built once per grid step, broadcast over the Bb rows ----
    row = jax.lax.broadcasted_iota(jnp.int32, (T, T), 0)
    col = jax.lax.broadcasted_iota(jnp.int32, (T, T), 1)
    wei = jnp.where((col <= row)[None, :, :], wei, -jnp.inf)

    # ---- numerically-stable softmax; exp in bf16 on v6e/v7x, denom in f32 ----
    wei = wei - jnp.max(wei, axis=-1, keepdims=True)
    p = jnp.exp(wei.astype(exp_dtype))                        # (Bb, T, T)
    denom = jnp.sum(p, axis=-1, keepdims=True, dtype=jnp.float32)
    inv_denom = pl.reciprocal(denom, approx=approx_recip)     # EUP slot

    # dropout: identity (eval mode)

    # ---- PV over the FULL padded kqv: N = Npad (=128) => lane-dense MXU output
    # and an unmasked 128-lane store.  Only columns [0, H) (the v block) are
    # meaningful; the wrapper slices them out.  Softmax normalization is deferred
    # to the output (one multiply on the lane-dense tile).
    out = jnp.einsum("bqk,bkn->bqn", p.astype(compute_dtype), kqv,
                     preferred_element_type=jnp.float32)      # (Bb, T, Npad) f32
    o_ref[...] = (out * inv_denom).astype(o_ref.dtype)


# --------------------------------- wrapper --------------------------------------

def head_forward(x, w_key, w_query, w_value, *, block_b=None,
                 compute_dtype=jnp.bfloat16):
    """Single causal attention head.  x: (B, T, C), weights: (C, H) -> (B, T, H).

    compute_dtype is the MXU input dtype (bf16 fast path on v6e/v7x; float32 gives
    an exact-reciprocal reference path).  Softmax max/sum/normalization are always
    f32.  x and the output keep x.dtype, so a bf16 surrounding model carries bf16
    activations through this kernel with no extra cast pass.
    """
    B, T, C = x.shape
    H = w_key.shape[1]
    assert C == n_embd and T <= block_size
    scale = C ** (-0.5)

    # Fold 1/sqrt(C) into the query weight (tiny one-time weight transform), fuse
    # the three projections, lay them out [v | k | q] and zero-pad the columns to a
    # multiple of 128 so the projection output / PV output are full lane tiles.
    w_fused = jnp.concatenate([w_value, w_key, w_query * scale], axis=1)   # (C, 3H)
    pad = (-w_fused.shape[1]) % 128
    if pad:
        w_fused = jnp.concatenate(
            [w_fused, jnp.zeros((C, pad), w_fused.dtype)], axis=1)
    w_fused = w_fused.astype(compute_dtype)
    Npad = w_fused.shape[1]

    multi_tc = _has_multiple_tensorcores()
    if block_b is None:
        block_b = _choose_block_b(B, prefer_split=multi_tc)
    assert B % block_b == 0, "block_b must divide the batch"
    grid = (B // block_b,)

    # bf16 exp only where the EUP is bf16-native (v6e/v7x) and we're on the bf16 path.
    exp_dtype = (jnp.float32 if (compute_dtype == jnp.float32 or _is_v5e())
                 else jnp.bfloat16)

    kernel = functools.partial(
        _head_kernel,
        head_size=H,
        compute_dtype=compute_dtype,
        exp_dtype=exp_dtype,
        approx_recip=(compute_dtype != jnp.float32),
    )

    grid_spec = pltpu.PrefetchScalarGridSpec(
        num_scalar_prefetch=0,
        grid=grid,
        in_specs=[
            pl.BlockSpec((block_b, T, C), lambda b: (b, 0, 0)),    # x tile
            pl.BlockSpec((C, Npad), lambda b: (0, 0)),             # fused weights
        ],
        out_specs=pl.BlockSpec((block_b, T, Npad), lambda b: (b, 0, 0)),
    )

    # VMEM note: at block_b<=32 the per-step footprint is a few MiB, well under the
    # 32 MiB scoped default on every generation (incl. v7x's 64 MiB physical VMEM),
    # so no vmem_limit_bytes override is needed at these shapes.
    out_padded = pl.pallas_call(
        kernel,
        out_shape=jax.ShapeDtypeStruct((B, T, Npad), x.dtype),
        grid_spec=grid_spec,
        compiler_params=pltpu.CompilerParams(
            dimension_semantics=("parallel",)),
    )(x, w_fused)

    return out_padded[:, :, :H]


def head_reference(x, w_key, w_query, w_value):
    """Pure-JAX reference matching the PyTorch forward (eval mode)."""
    B, T, C = x.shape
    k = x @ w_key
    q = x @ w_query
    v = x @ w_value
    wei = (q @ jnp.swapaxes(k, -2, -1)) * C ** (-0.5)
    mask = jnp.tril(jnp.ones((T, T), dtype=bool))
    wei = jnp.where(mask, wei, -jnp.inf)
    wei = jax.nn.softmax(wei, axis=-1)
    return wei @ v


if __name__ == "__main__":
    key = jax.random.PRNGKey(0)
    head_size = 32
    bound = 1.0 / (n_embd ** 0.5)   # nn.Linear-style uniform init

    kk, kq, kv, kx1, kx2 = jax.random.split(key, 5)
    w_key = jax.random.uniform(kk, (n_embd, head_size), jnp.float32, -bound, bound)
    w_query = jax.random.uniform(kq, (n_embd, head_size), jnp.float32, -bound, bound)
    w_value = jax.random.uniform(kv, (n_embd, head_size), jnp.float32, -bound, bound)

    # Case 1: small shapes (B=2, T=16).
    B1, T1 = 2, 16
    x1 = jax.random.normal(kx1, (B1, T1, n_embd), dtype=jnp.float32)

    ref1 = head_reference(x1, w_key, w_query, w_value)

    # f32 compute path (exact reciprocal): faithful reference path.
    out_f32 = jax.block_until_ready(
        head_forward(x1, w_key, w_query, w_value, compute_dtype=jnp.float32))
    assert out_f32.shape == (B1, T1, head_size)
    assert jnp.allclose(out_f32, ref1, atol=1e-2, rtol=1e-2), "f32 path mismatch"

    # bf16 MXU-input fast path (default): looser tolerance.
    out_bf16 = jax.block_until_ready(head_forward(x1, w_key, w_query, w_value))
    assert out_bf16.shape == (B1, T1, head_size)
    assert jnp.allclose(out_bf16, ref1, atol=5e-2, rtol=5e-2), "bf16 path mismatch"

    # Case 2: exercise batched blocking at full T=128 (grid=1 on v5e/v6e, 2 on v7x).
    B2, T2 = 8, block_size
    x2 = jax.random.normal(kx2, (B2, T2, n_embd), dtype=jnp.float32)
    out2 = jax.block_until_ready(head_forward(x2, w_key, w_query, w_value))
    ref2 = head_reference(x2, w_key, w_query, w_value)
    assert out2.shape == (B2, T2, head_size)
    assert jnp.allclose(out2, ref2, atol=5e-2, rtol=5e-2), "batched bf16 mismatch"

    print("KERNEL_OK")
</pallas_src>

<mosaic_0001>
module attributes {stable_mosaic.version = 11 : i64} {
  func.func @_head_kernel(%arg0: i32, %arg1: memref<2x16x128xf32, #tpu.memory_space<vmem>>, %arg2: memref<128x128xf32, #tpu.memory_space<vmem>>, %arg3: memref<2x16x128xf32, #tpu.memory_space<vmem>>) attributes {dimension_semantics = [#tpu.dimension_semantics<parallel>], iteration_bounds = array<i64: 1>, scalar_prefetch = 0 : i64, scratch_operands = 0 : i64, tpu.core_type = #tpu.core_type<tc>, window_params = [{transform_indices = @transform_0, window_bounds = array<i64: 2, 16, 128>}, {pipeline_mode = #tpu.pipeline_mode<synchronous>, transform_indices = @transform_1, window_bounds = array<i64: 128, 128>}, {transform_indices = @transform_2, window_bounds = array<i64: 2, 16, 128>}]} {
    %c0 = arith.constant 0 : index
    %c0_0 = arith.constant 0 : index
    %c0_1 = arith.constant 0 : index
    %0 = vector.load %arg1[%c0, %c0_0, %c0_1] : memref<2x16x128xf32, #tpu.memory_space<vmem>>, vector<2x16x128xf32>
    %1 = vector.shape_cast %0 : vector<2x16x128xf32> to vector<32x128xf32>
    %c0_2 = arith.constant 0 : index
    %c0_3 = arith.constant 0 : index
    %2 = vector.load %arg2[%c0_2, %c0_3] : memref<128x128xf32, #tpu.memory_space<vmem>>, vector<128x128xf32>
    %cst = arith.constant dense<0.000000e+00> : vector<32x128xf32>
    %3 = tpu.matmul %1, %2, %cst {dimension_numbers = #tpu.dot_dimension_numbers<[1], [0], [0], [1], [0, 0, 1, 1], [], []>} : vector<32x128xf32>, vector<128x128xf32>, vector<32x128xf32> -> vector<32x128xf32>
    %4 = vector.shape_cast %3 : vector<32x128xf32> to vector<2x16x128xf32>
    %5 = vector.extract_strided_slice %4 {offsets = [0, 0, 32], sizes = [2, 16, 32], strides = [1, 1, 1]} : vector<2x16x128xf32> to vector<2x16x32xf32>
    %6 = vector.extract_strided_slice %4 {offsets = [0, 0, 64], sizes = [2, 16, 32], strides = [1, 1, 1]} : vector<2x16x128xf32> to vector<2x16x32xf32>
    "tpu.trace_start"() <{level = 10 : i32, message = "bqh,bkh->bqk"}> : () -> ()
    %cst_4 = arith.constant dense<0.000000e+00> : vector<2x16x16xf32>
    %7 = tpu.matmul %6, %5, %cst_4 {dimension_numbers = #tpu.dot_dimension_numbers<[2], [2], [1], [1], [0, 0, 0, 1, 1, 1], [0], [0]>} : vector<2x16x32xf32>, vector<2x16x32xf32>, vector<2x16x16xf32> -> vector<2x16x16xf32>
    "tpu.trace_stop"() : () -> ()
    %8 = tpu.iota {dimensions = array<i32: 0>} : vector<16x16xi32>
    %9 = tpu.iota {dimensions = array<i32: 1>} : vector<16x16xi32>
    %10 = arith.cmpi sle, %9, %8 : vector<16x16xi32>
    %11 = vector.shape_cast %10 : vector<16x16xi1> to vector<1x16x16xi1>
    %cst_5 = arith.constant 0xFF800000 : f32
    %12 = vector.shape_cast %11 : vector<1x16x16xi1> to vector<1x16x16xi1>
    %13 = vector.broadcast %12 : vector<1x16x16xi1> to vector<2x16x16xi1>
    %14 = vector.broadcast %cst_5 : f32 to vector<2x16x16xf32>
    %15 = arith.select %13, %7, %14 : vector<2x16x16xi1>, vector<2x16x16xf32>
    %cst_6 = arith.constant dense<0xFF800000> : vector<2x16xf32>
    %16 = vector.multi_reduction <maximumf>, %15, %cst_6 [2] : vector<2x16x16xf32> to vector<2x16xf32>
    %17 = vector.shape_cast %16 : vector<2x16xf32> to vector<2x16x1xf32>
    %18 = vector.broadcast %17 : vector<2x16x1xf32> to vector<2x16x16xf32>
    %19 = arith.subf %15, %18 : vector<2x16x16xf32>
    %20 = math.exp %19 : vector<2x16x16xf32>
    %cst_7 = arith.constant dense<0.000000e+00> : vector<2x16xf32>
    %21 = vector.multi_reduction <add>, %20, %cst_7 [2] : vector<2x16x16xf32> to vector<2x16xf32>
    %22 = vector.shape_cast %21 : vector<2x16xf32> to vector<2x16x1xf32>
    %23 = tpu.reciprocal %22 : vector<2x16x1xf32> -> vector<2x16x1xf32>
    "tpu.trace_start"() <{level = 10 : i32, message = "bqk,bkn->bqn"}> : () -> ()
    %cst_8 = arith.constant dense<0.000000e+00> : vector<2x16x128xf32>
    %24 = tpu.matmul %20, %4, %cst_8 {dimension_numbers = #tpu.dot_dimension_numbers<[2], [1], [1], [2], [0, 0, 0, 1, 1, 2], [0], [0]>} : vector<2x16x16xf32>, vector<2x16x128xf32>, vector<2x16x128xf32> -> vector<2x16x128xf32>
    "tpu.trace_stop"() : () -> ()
    %25 = vector.broadcast %23 : vector<2x16x1xf32> to vector<2x16x128xf32>
    %26 = arith.mulf %24, %25 : vector<2x16x128xf32>
    %c0_9 = arith.constant 0 : index
    %c0_10 = arith.constant 0 : index
    %c0_11 = arith.constant 0 : index
    %27 = vector.load %arg3[%c0_9, %c0_10, %c0_11] : memref<2x16x128xf32, #tpu.memory_space<vmem>>, vector<2x16x128xf32>
    tpu.vector_store %arg3[%c0_9, %c0_10, %c0_11], %26 {strides = array<i32>} : memref<2x16x128xf32, #tpu.memory_space<vmem>>, vector<2x16x128xf32>,
    return
  }
  func.func @transform_0(%arg0: i32) -> (i32, i32, i32) {
    %c0_i32 = arith.constant 0 : i32
    %c0_i32_0 = arith.constant 0 : i32
    %c0_i32_1 = arith.constant 0 : i32
    return %arg0, %c0_i32, %c0_i32_0 : i32, i32, i32
  }
  func.func @transform_1(%arg0: i32) -> (i32, i32) {
    %c0_i32 = arith.constant 0 : i32
    %c0_i32_0 = arith.constant 0 : i32
    %c0_i32_1 = arith.constant 0 : i32
    return %c0_i32, %c0_i32_0 : i32, i32
  }
  func.func @transform_2(%arg0: i32) -> (i32, i32, i32) {
    %c0_i32 = arith.constant 0 : i32
    %c0_i32_0 = arith.constant 0 : i32
    %c0_i32_1 = arith.constant 0 : i32
    return %arg0, %c0_i32, %c0_i32_0 : i32, i32, i32
  }
}

</mosaic_0001>

<llo_original>
// kernel: tpu_custom_call.1
$region0: #{tpu_custom_call.1}
  #allocation0 [shape = 'u32[]', space=smem, size = 0x4, offset = 0x4, fixed_abs, tag = 'smem constant byte address 0x4 - core index']
  #allocation1 [shape = 'u32[144,128]{1,0:T(1,128)}', space=vmem, size = 0x12000, scoped, tag = 'internal scratch']
  %s0 = inlined_call_operand.hbm [shape: f32[2,16,128], index: 0, kind: input, shape index: {}]
  %s1 = inlined_call_operand.hbm [shape: f32[128,128], index: 1, kind: input, shape index: {}]
  %s2 = inlined_call_operand.hbm [shape: f32[2,16,128], index: 2, kind: output, shape index: {}]
  %s3 = sld [smem:[#allocation0]]
  $region26: #{tpu_custom_call.1} parent=0
    _
  %s5 = ssub.s32 1, %s3
  %s6 = scalar_select 0, %s5, %s3
  $region1: #{tpu_custom_call.1} parent=0
    #allocation2 [shape = 'u8[16384]{0}', space=vmem, size = 0x4000, scoped, tag = 'input window, operand 0, single buffered']
    #allocation3 [shape = 's32[1]{0}', space=sflag, size = 0x4, scoped, tag = 'scoped memory for tpu_custom_call.1']
    #allocation4 [shape = 's32[1]{0}', space=sflag, size = 0x4, scoped, tag = 'scoped memory for tpu_custom_call.1']
    #allocation5 [shape = 'u8[65536]{0}', space=vmem, size = 0x10000, scoped, tag = 'input window, operand 1, single buffered']
    #allocation6 [shape = 's32[1]{0}', space=sflag, size = 0x4, scoped, tag = 'scoped memory for tpu_custom_call.1']
    #allocation7 [shape = 'u8[16384]{0}', space=vmem, size = 0x4000, scoped, tag = 'output window, operand 0, single buffered']
    %7 = vsyncpa [#allocation3], 0
    %8 = vsyncpa [#allocation6], 0
    %9 = vsyncpa [#allocation4], 0
    // Predicated region
    $region2: #{tpu_custom_call.1} parent=1 // pred_check
      _
    $region3: #{tpu_custom_call.1} parent=1 // pred_check_branch
      %11 = sbr.rel (0) target = $region5
    $region4: #{tpu_custom_call.1} parent=1 // pred_region
      %s13 = ssub.s32 512, 512
      %14 = vsyncadd [#allocation3], %s13
      %s15 = sshll.u32 [#allocation2], 4
      %s16 = int_to_ptr.vmem [resolvable:$true] %s15
      %21 = dma.hbm_to_vmem [thread:$0]  %s0, 512, %s16, [#allocation3], 128, 128, 8
    $region5: #{tpu_custom_call.1} parent=1 // pred_fallthru
      _
    // Predicated region
    $region6: #{tpu_custom_call.1} parent=1 // pred_check
      _
    $region7: #{tpu_custom_call.1} parent=1 // pred_check_branch
      %23 = sbr.rel (0) target = $region9
    $region8: #{tpu_custom_call.1} parent=1 // pred_region
      %s25 = ssub.s32 2048, 2048
      %26 = vsyncadd [#allocation6], %s25
      %s27 = sshll.u32 [#allocation5], 4
      %s28 = int_to_ptr.vmem [resolvable:$true] %s27
      %33 = dma.hbm_to_vmem [thread:$0]  %s1, 2048, %s28, [#allocation6], 128, 128, 8
    $region9: #{tpu_custom_call.1} parent=1 // pred_fallthru
      _
    // Predicated region
    $region10: #{tpu_custom_call.1} parent=1 // pred_check
      _
    $region11: #{tpu_custom_call.1} parent=1 // pred_check_branch
      %35 = sbr.rel (0) target = $region13
    $region12: #{tpu_custom_call.1} parent=1 // pred_region
      %36 = dma.done [#allocation3], 512
    $region13: #{tpu_custom_call.1} parent=1 // pred_fallthru
      _
    // Predicated region
    $region14: #{tpu_custom_call.1} parent=1 // pred_check
      _
    $region15: #{tpu_custom_call.1} parent=1 // pred_check_branch
      %38 = sbr.rel (0) target = $region17
    $region16: #{tpu_custom_call.1} parent=1 // pred_region
      %39 = dma.done [#allocation6], 2048
    $region17: #{tpu_custom_call.1} parent=1 // pred_fallthru
      _
    %v40 = vld [vmem:[#allocation2] sm:$0xff]
    %v41 = vld [vmem:[#allocation2 + $0x8] sm:$0xff]
    %v42 = vld [vmem:[#allocation2 + $0x10] sm:$0xff]
    %v43 = vld [vmem:[#allocation2 + $0x18] sm:$0xff]
    %v44 = vld [vmem:[#allocation5] sm:$0xff]
    %v45 = vld [vmem:[#allocation5 + $0x8] sm:$0xff]
    %v46 = vld [vmem:[#allocation5 + $0x10] sm:$0xff]
    %v47 = vld [vmem:[#allocation5 + $0x18] sm:$0xff]
    %v48 = vld [vmem:[#allocation5 + $0x20] sm:$0xff]
    %v49 = vld [vmem:[#allocation5 + $0x28] sm:$0xff]
    %v50 = vld [vmem:[#allocation5 + $0x30] sm:$0xff]
    %v51 = vld [vmem:[#allocation5 + $0x38] sm:$0xff]
    %v52 = vld [vmem:[#allocation5 + $0x40] sm:$0xff]
    %v53 = vld [vmem:[#allocation5 + $0x48] sm:$0xff]
    %v54 = vld [vmem:[#allocation5 + $0x50] sm:$0xff]
    %v55 = vld [vmem:[#allocation5 + $0x58] sm:$0xff]
    %v56 = vld [vmem:[#allocation5 + $0x60] sm:$0xff]
    %v57 = vld [vmem:[#allocation5 + $0x68] sm:$0xff]
    %v58 = vld [vmem:[#allocation5 + $0x70] sm:$0xff]
    %v59 = vld [vmem:[#allocation5 + $0x78] sm:$0xff]
    %60 = vmatprep.subr.mxu0 0.0
    %61 = vmatpush1.msra.mxu0 %v44
    %62 = vmatprep.subr.mxu0 0.0
    %63 = vmatpush1.msra.mxu0 %v45
    %64 = vmatprep.subr.mxu0 0.0
    %65 = vmatpush1.msra.mxu0 %v46
    %66 = vmatprep.subr.mxu0 0.0
    %67 = vmatpush1.msra.mxu0 %v47
    %68 = vmatprep.subr.mxu0 0.0
    %69 = vmatpush1.msra.mxu0 %v48
    %70 = vmatprep.subr.mxu0 0.0
    %71 = vmatpush1.msra.mxu0 %v49
    %72 = vmatprep.subr.mxu0 0.0
    %73 = vmatpush1.msra.mxu0 %v50
    %74 = vmatprep.subr.mxu0 0.0
    %75 = vmatpush1.msra.mxu0 %v51
    %76 = vmatprep.subr.mxu0 0.0
    %77 = vmatpush1.msra.mxu0 %v52
    %78 = vmatprep.subr.mxu0 0.0
    %79 = vmatpush1.msra.mxu0 %v53
    %80 = vmatprep.subr.mxu0 0.0
    %81 = vmatpush1.msra.mxu0 %v54
    %82 = vmatprep.subr.mxu0 0.0
    %83 = vmatpush1.msra.mxu0 %v55
    %84 = vmatprep.subr.mxu0 0.0
    %85 = vmatpush1.msra.mxu0 %v56
    %86 = vmatprep.subr.mxu0 0.0
    %87 = vmatpush1.msra.mxu0 %v57
    %88 = vmatprep.subr.mxu0 0.0
    %89 = vmatpush1.msra.mxu0 %v58
    %90 = vmatprep.subr.mxu0 0.0
    %91 = vmatpush1.msra.mxu0 %v59
    %92 = vmatprep.subr.mxu0 0.0
    %93 = vmatpush1.msra.mxu0 0.0
    %94 = vmatprep.subr.mxu0 0.0
    %95 = vmatpush1.msra.mxu0 0.0
    %96 = vmatprep.subr.mxu0 0.0
    %97 = vmatpush1.msra.mxu0 0.0
    %98 = vmatprep.subr.mxu0 0.0
    %99 = vmatpush1.msra.mxu0 0.0
    %100 = vmatprep.subr.mxu0 0.0
    %101 = vmatpush1.msra.mxu0 0.0
    %102 = vmatprep.subr.mxu0 0.0
    %103 = vmatpush1.msra.mxu0 0.0
    %104 = vmatprep.subr.mxu0 0.0
    %105 = vmatpush1.msra.mxu0 0.0
    %106 = vmatprep.subr.mxu0 0.0
    %107 = vmatpush1.msra.mxu0 0.0
    %108 = vmatprep.subr.mxu0 0.0
    %109 = vmatpush1.msra.mxu0 0.0
    %110 = vmatprep.subr.mxu0 0.0
    %111 = vmatpush1.msra.mxu0 0.0
    %112 = vmatprep.subr.mxu0 0.0
    %113 = vmatpush1.msra.mxu0 0.0
    %114 = vmatprep.subr.mxu0 0.0
    %115 = vmatpush1.msra.mxu0 0.0
    %116 = vmatprep.subr.mxu0 0.0
    %117 = vmatpush1.msra.mxu0 0.0
    %118 = vmatprep.subr.mxu0 0.0
    %119 = vmatpush1.msra.mxu0 0.0
    %120 = vmatprep.subr.mxu0 0.0
    %121 = vmatpush1.msra.mxu0 0.0
    %122 = vmatprep.subr.mxu0 0.0
    %123 = vmatpush1.msra.mxu0 0.0
    %124 = vmatprep.mubr.f32.mxu0 0.0
    %125 = vmatmul.mubr.f32.gmra.mrb[0].mxu0 %v40
    %v126 = vpop.f32.mrb[0].mxu0
    %v127 = vadd.f32 0.0, %v126
    %v128 = vpop.f32.mrb[0].mxu0
    %129 = vmatprep.mubr.f32.mxu0 0.0
    %130 = vmatmul.mubr.f32.gmra.mrb[0].mxu0 %v41
    %v131 = vpop.f32.mrb[0].mxu0
    %v132 = vadd.f32 0.0, %v131
    %v133 = vpop.f32.mrb[0].mxu0
    %134 = vmatprep.mubr.f32.mxu0 0.0
    %135 = vmatmul.mubr.f32.gmra.mrb[0].mxu0 %v42
    %v136 = vpop.f32.mrb[0].mxu0
    %v137 = vadd.f32 0.0, %v136
    %v138 = vpop.f32.mrb[0].mxu0
    %139 = vmatprep.mubr.f32.mxu0 0.0
    %140 = vmatmul.mubr.f32.gmra.mrb[0].mxu0 %v43
    %v141 = vpop.f32.mrb[0].mxu0
    %v142 = vadd.f32 0.0, %v141
    %v143 = vpop.f32.mrb[0].mxu0
    %144 = vdwg.mxu0
    %147 = vrot.lane.b32.xlu0 %v127, 64
    %v148 = vpop.permute.xlu0 %147
    %149 = vrot.lane.b32.xlu0 %v132, 64
    %v150 = vpop.permute.xlu0 %149
    %151 = vrot.lane.b32.xlu0 %v127, 96
    %v152 = vpop.permute.xlu0 %151
    %153 = vrot.lane.b32.xlu0 %v132, 96
    %v154 = vpop.permute.xlu0 %153
    %vm155 = vcmask 261120
    %v156 = vsel %vm155, %v148, 0
    %v158 = vsel %vm155, %v150, 0
    %v160 = vsel %vm155, %v152, 0
    %v162 = vsel %vm155, %v154, 0
    %164 = vmatprep.subr.mxu0 0.0
    %165 = vmatpush1.xpose.msra.mxu0 %v160
    %166 = vmatprep.subr.mxu0 0.0
    %167 = vmatpush1.xpose.msra.mxu0 %v162
    %168 = vmatprep.subr.mxu0 0.0
    %169 = vmatpush1.xpose.msra.mxu0 0.0
    %170 = vmatprep.subr.mxu0 0.0
    %171 = vmatpush1.xpose.msra.mxu0 0.0
    %172 = vmatprep.subr.mxu0 0.0
    %173 = vmatpush1.xpose.msra.mxu0 0.0
    %174 = vmatprep.subr.mxu0 0.0
    %175 = vmatpush1.xpose.msra.mxu0 0.0
    %176 = vmatprep.subr.mxu0 0.0
    %177 = vmatpush1.xpose.msra.mxu0 0.0
    %178 = vmatprep.subr.mxu0 0.0
    %179 = vmatpush1.xpose.msra.mxu0 0.0
    %180 = vmatprep.subr.mxu0 0.0
    %181 = vmatpush1.xpose.msra.mxu0 0.0
    %182 = vmatprep.subr.mxu0 0.0
    %183 = vmatpush1.xpose.msra.mxu0 0.0
    %184 = vmatprep.subr.mxu0 0.0
    %185 = vmatpush1.xpose.msra.mxu0 0.0
    %186 = vmatprep.subr.mxu0 0.0
    %187 = vmatpush1.xpose.msra.mxu0 0.0
    %188 = vmatprep.subr.mxu0 0.0
    %189 = vmatpush1.xpose.msra.mxu0 0.0
    %190 = vmatprep.subr.mxu0 0.0
    %191 = vmatpush1.xpose.msra.mxu0 0.0
    %192 = vmatprep.subr.mxu0 0.0
    %193 = vmatpush1.xpose.msra.mxu0 0.0
    %194 = vmatprep.subr.mxu0 0.0
    %195 = vmatpush1.xpose.msra.mxu0 0.0
    %196 = vmatprep.subr.mxu0 0.0
    %197 = vmatpush1.xpose.msra.mxu0 0.0
    %198 = vmatprep.subr.mxu0 0.0
    %199 = vmatpush1.xpose.msra.mxu0 0.0
    %200 = vmatprep.subr.mxu0 0.0
    %201 = vmatpush1.xpose.msra.mxu0 0.0
    %202 = vmatprep.subr.mxu0 0.0
    %203 = vmatpush1.xpose.msra.mxu0 0.0
    %204 = vmatprep.subr.mxu0 0.0
    %205 = vmatpush1.xpose.msra.mxu0 0.0
    %206 = vmatprep.subr.mxu0 0.0
    %207 = vmatpush1.xpose.msra.mxu0 0.0
    %208 = vmatprep.subr.mxu0 0.0
    %209 = vmatpush1.xpose.msra.mxu0 0.0
    %210 = vmatprep.subr.mxu0 0.0
    %211 = vmatpush1.xpose.msra.mxu0 0.0
    %212 = vmatprep.subr.mxu0 0.0
    %213 = vmatpush1.xpose.msra.mxu0 0.0
    %214 = vmatprep.subr.mxu0 0.0
    %215 = vmatpush1.xpose.msra.mxu0 0.0
    %216 = vmatprep.subr.mxu0 0.0
    %217 = vmatpush1.xpose.msra.mxu0 0.0
    %218 = vmatprep.subr.mxu0 0.0
    %219 = vmatpush1.xpose.msra.mxu0 0.0
    %220 = vmatprep.subr.mxu0 0.0
    %221 = vmatpush1.xpose.msra.mxu0 0.0
    %222 = vmatprep.subr.mxu0 0.0
    %223 = vmatpush1.xpose.msra.mxu0 0.0
    %224 = vmatprep.subr.mxu0 0.0
    %225 = vmatpush1.xpose.msra.mxu0 0.0
    %226 = vmatprep.subr.mxu0 0.0
    %227 = vmatpush1.xpose.msra.mxu0 0.0
    %228 = vmatprep.mubr.f32.mxu0 0.0
    %229 = vmatmul.mubr.f32.gmra.mrb[0].mxu0 %v156
    %v230 = vpop.f32.mrb[0].mxu0
    %v231 = vadd.f32 0.0, %v230
    %v232 = vpop.f32.mrb[0].mxu0
    %233 = vmatprep.mubr.f32.mxu0 0.0
    %234 = vmatmul.mubr.f32.gmra.mrb[0].mxu0 %v158
    %v235 = vpop.f32.mrb[0].mxu0
    %v236 = vadd.f32 0.0, %v235
    %v237 = vpop.f32.mrb[0].mxu0
    %238 = vdwg.mxu0
    %241 = vrot.lane.b32.xlu0 %v137, 64
    %v242 = vpop.permute.xlu0 %241
    %243 = vrot.lane.b32.xlu0 %v142, 64
    %v244 = vpop.permute.xlu0 %243
    %245 = vrot.lane.b32.xlu0 %v137, 96
    %v246 = vpop.permute.xlu0 %245
    %247 = vrot.lane.b32.xlu0 %v142, 96
    %v248 = vpop.permute.xlu0 %247
    %v249 = vsel %vm155, %v242, 0
    %v251 = vsel %vm155, %v244, 0
    %v253 = vsel %vm155, %v246, 0
    %v255 = vsel %vm155, %v248, 0
    %257 = vmatprep.subr.mxu0 0.0
    %258 = vmatpush1.xpose.msra.mxu0 %v253
    %259 = vmatprep.subr.mxu0 0.0
    %260 = vmatpush1.xpose.msra.mxu0 %v255
    %261 = vmatprep.subr.mxu0 0.0
    %262 = vmatpush1.xpose.msra.mxu0 0.0
    %263 = vmatprep.subr.mxu0 0.0
    %264 = vmatpush1.xpose.msra.mxu0 0.0
    %265 = vmatprep.subr.mxu0 0.0
    %266 = vmatpush1.xpose.msra.mxu0 0.0
    %267 = vmatprep.subr.mxu0 0.0
    %268 = vmatpush1.xpose.msra.mxu0 0.0
    %269 = vmatprep.subr.mxu0 0.0
    %270 = vmatpush1.xpose.msra.mxu0 0.0
    %271 = vmatprep.subr.mxu0 0.0
    %272 = vmatpush1.xpose.msra.mxu0 0.0
    %273 = vmatprep.subr.mxu0 0.0
    %274 = vmatpush1.xpose.msra.mxu0 0.0
    %275 = vmatprep.subr.mxu0 0.0
    %276 = vmatpush1.xpose.msra.mxu0 0.0
    %277 = vmatprep.subr.mxu0 0.0
    %278 = vmatpush1.xpose.msra.mxu0 0.0
    %279 = vmatprep.subr.mxu0 0.0
    %280 = vmatpush1.xpose.msra.mxu0 0.0
    %281 = vmatprep.subr.mxu0 0.0
    %282 = vmatpush1.xpose.msra.mxu0 0.0
    %283 = vmatprep.subr.mxu0 0.0
    %284 = vmatpush1.xpose.msra.mxu0 0.0
    %285 = vmatprep.subr.mxu0 0.0
    %286 = vmatpush1.xpose.msra.mxu0 0.0
    %287 = vmatprep.subr.mxu0 0.0
    %288 = vmatpush1.xpose.msra.mxu0 0.0
    %289 = vmatprep.subr.mxu0 0.0
    %290 = vmatpush1.xpose.msra.mxu0 0.0
    %291 = vmatprep.subr.mxu0 0.0
    %292 = vmatpush1.xpose.msra.mxu0 0.0
    %293 = vmatprep.subr.mxu0 0.0
    %294 = vmatpush1.xpose.msra.mxu0 0.0
    %295 = vmatprep.subr.mxu0 0.0
    %296 = vmatpush1.xpose.msra.mxu0 0.0
    %297 = vmatprep.subr.mxu0 0.0
    %298 = vmatpush1.xpose.msra.mxu0 0.0
    %299 = vmatprep.subr.mxu0 0.0
    %300 = vmatpush1.xpose.msra.mxu0 0.0
    %301 = vmatprep.subr.mxu0 0.0
    %302 = vmatpush1.xpose.msra.mxu0 0.0
    %303 = vmatprep.subr.mxu0 0.0
    %304 = vmatpush1.xpose.msra.mxu0 0.0
    %305 = vmatprep.subr.mxu0 0.0
    %306 = vmatpush1.xpose.msra.mxu0 0.0
    %307 = vmatprep.subr.mxu0 0.0
    %308 = vmatpush1.xpose.msra.mxu0 0.0
    %309 = vmatprep.subr.mxu0 0.0
    %310 = vmatpush1.xpose.msra.mxu0 0.0
    %311 = vmatprep.subr.mxu0 0.0
    %312 = vmatpush1.xpose.msra.mxu0 0.0
    %313 = vmatprep.subr.mxu0 0.0
    %314 = vmatpush1.xpose.msra.mxu0 0.0
    %315 = vmatprep.subr.mxu0 0.0
    %316 = vmatpush1.xpose.msra.mxu0 0.0
    %317 = vmatprep.subr.mxu0 0.0
    %318 = vmatpush1.xpose.msra.mxu0 0.0
    %319 = vmatprep.subr.mxu0 0.0
    %320 = vmatpush1.xpose.msra.mxu0 0.0
    %321 = vmatprep.mubr.f32.mxu0 0.0
    %322 = vmatmul.mubr.f32.gmra.mrb[0].mxu0 %v249
    %v323 = vpop.f32.mrb[0].mxu0
    %v324 = vadd.f32 0.0, %v323
    %v325 = vpop.f32.mrb[0].mxu0
    %326 = vmatprep.mubr.f32.mxu0 0.0
    %327 = vmatmul.mubr.f32.gmra.mrb[0].mxu0 %v251
    %v328 = vpop.f32.mrb[0].mxu0
    %v329 = vadd.f32 0.0, %v328
    %v330 = vpop.f32.mrb[0].mxu0
    %331 = vdwg.mxu0
    %v332 = vlaneseq
    %v333 = vshrl.u32 %v332, 7
    %v334 = vadd.s32 %v333, 8
    %v335 = vlaneseq
    %v336 = vand.u32 %v335, 127
    %vm337 = vcmp.le.s32.totalorder %v336, %v333
    %vm338 = vcmp.le.s32.totalorder %v336, %v334
    %v339 = vsel %vm337, 1, 0
    %v340 = vsel %vm338, 1, 0
    %vm341 = vcmp.eq.s32.totalorder %v339, 1
    %vm342 = vcmp.eq.s32.totalorder %v340, 1
    %v343 = vsel %vm341, %v231, -inf
    %v344 = vsel %vm342, %v236, -inf
    %v345 = vsel %vm341, %v324, -inf
    %v346 = vsel %vm342, %v329, -inf
    %vm347 = vcmask 130048
    %v348 = vsel %vm347, %v343, -inf
    %349 = vmax.xlane.f32.xlu0 %v348
    %v350 = vpop.xlane.xlu0 %349
    %v351 = vsel %vm347, %v344, -inf
    %352 = vmax.xlane.f32.xlu0 %v351
    %v353 = vpop.xlane.xlu0 %352
    %v354 = vsel %vm347, %v345, -inf
    %355 = vmax.xlane.f32.xlu0 %v354
    %v356 = vpop.xlane.xlu0 %355
    %v357 = vsel %vm347, %v346, -inf
    %358 = vmax.xlane.f32.xlu0 %v357
    %v359 = vpop.xlane.xlu0 %358
    %v360 = vsub.f32 %v343, %v350
    %v361 = vsub.f32 %v344, %v353
    %v362 = vsub.f32 %v345, %v356
    %v363 = vsub.f32 %v346, %v359
    %v364 = vmul.f32 %v360, 1.442695
    %v365 = vpow.pop %v364
    %v366 = vmul.f32 %v361, 1.442695
    %v367 = vpow.pop %v366
    %v368 = vmul.f32 %v362, 1.442695
    %v369 = vpow.pop %v368
    %v370 = vmul.f32 %v363, 1.442695
    %v371 = vpow.pop %v370
    %v372 = vsel %vm347, %v365, 0.0
    %373 = vadd.xlane.f32.xlu0 %v372
    %v374 = vpop.xlane.xlu0 %373
    %v375 = vsel %vm347, %v367, 0.0
    %376 = vadd.xlane.f32.xlu0 %v375
    %v377 = vpop.xlane.xlu0 %376
    %v378 = vsel %vm347, %v369, 0.0
    %379 = vadd.xlane.f32.xlu0 %v378
    %v380 = vpop.xlane.xlu0 %379
    %v381 = vsel %vm347, %v371, 0.0
    %382 = vadd.xlane.f32.xlu0 %v381
    %v383 = vpop.xlane.xlu0 %382
    %v384 = vrcp.pop %v374
    %v385 = vrcp.pop %v377
    %v386 = vrcp.pop %v380
    %v387 = vrcp.pop %v383
    %v389 = vsel %vm347, %v365, 0
    %v392 = vsel %vm347, %v367, 0
    %394 = vmatprep.subr.mxu0 0.0
    %395 = vmatpush1.msra.mxu0 %v127
    %396 = vmatprep.subr.mxu0 0.0
    %397 = vmatpush1.msra.mxu0 %v132
    %398 = vmatprep.subr.mxu0 0.0
    %399 = vmatpush1.msra.mxu0 0.0
    %400 = vmatprep.subr.mxu0 0.0
    %401 = vmatpush1.msra.mxu0 0.0
    %402 = vmatprep.subr.mxu0 0.0
    %403 = vmatpush1.msra.mxu0 0.0
    %404 = vmatprep.subr.mxu0 0.0
    %405 = vmatpush1.msra.mxu0 0.0
    %406 = vmatprep.subr.mxu0 0.0
    %407 = vmatpush1.msra.mxu0 0.0
    %408 = vmatprep.subr.mxu0 0.0
    %409 = vmatpush1.msra.mxu0 0.0
    %410 = vmatprep.subr.mxu0 0.0
    %411 = vmatpush1.msra.mxu0 0.0
    %412 = vmatprep.subr.mxu0 0.0
    %413 = vmatpush1.msra.mxu0 0.0
    %414 = vmatprep.subr.mxu0 0.0
    %415 = vmatpush1.msra.mxu0 0.0
    %416 = vmatprep.subr.mxu0 0.0
    %417 = vmatpush1.msra.mxu0 0.0
    %418 = vmatprep.subr.mxu0 0.0
    %419 = vmatpush1.msra.mxu0 0.0
    %420 = vmatprep.subr.mxu0 0.0
    %421 = vmatpush1.msra.mxu0 0.0
    %422 = vmatprep.subr.mxu0 0.0
    %423 = vmatpush1.msra.mxu0 0.0
    %424 = vmatprep.subr.mxu0 0.0
    %425 = vmatpush1.msra.mxu0 0.0
    %426 = vmatprep.subr.mxu0 0.0
    %427 = vmatpush1.msra.mxu0 0.0
    %428 = vmatprep.subr.mxu0 0.0
    %429 = vmatpush1.msra.mxu0 0.0
    %430 = vmatprep.subr.mxu0 0.0
    %431 = vmatpush1.msra.mxu0 0.0
    %432 = vmatprep.subr.mxu0 0.0
    %433 = vmatpush1.msra.mxu0 0.0
    %434 = vmatprep.subr.mxu0 0.0
    %435 = vmatpush1.msra.mxu0 0.0
    %436 = vmatprep.subr.mxu0 0.0
    %437 = vmatpush1.msra.mxu0 0.0
    %438 = vmatprep.subr.mxu0 0.0
    %439 = vmatpush1.msra.mxu0 0.0
    %440 = vmatprep.subr.mxu0 0.0
    %441 = vmatpush1.msra.mxu0 0.0
    %442 = vmatprep.subr.mxu0 0.0
    %443 = vmatpush1.msra.mxu0 0.0
    %444 = vmatprep.subr.mxu0 0.0
    %445 = vmatpush1.msra.mxu0 0.0
    %446 = vmatprep.subr.mxu0 0.0
    %447 = vmatpush1.msra.mxu0 0.0
    %448 = vmatprep.subr.mxu0 0.0
    %449 = vmatpush1.msra.mxu0 0.0
    %450 = vmatprep.subr.mxu0 0.0
    %451 = vmatpush1.msra.mxu0 0.0
    %452 = vmatprep.subr.mxu0 0.0
    %453 = vmatpush1.msra.mxu0 0.0
    %454 = vmatprep.subr.mxu0 0.0
    %455 = vmatpush1.msra.mxu0 0.0
    %456 = vmatprep.subr.mxu0 0.0
    %457 = vmatpush1.msra.mxu0 0.0
    %458 = vmatprep.mubr.f32.mxu0 0.0
    %459 = vmatmul.mubr.f32.gmra.mrb[0].mxu0 %v389
    %v460 = vpop.f32.mrb[0].mxu0
    %v461 = vadd.f32 0.0, %v460
    %v462 = vpop.f32.mrb[0].mxu0
    %463 = vmatprep.mubr.f32.mxu0 0.0
    %464 = vmatmul.mubr.f32.gmra.mrb[0].mxu0 %v392
    %v465 = vpop.f32.mrb[0].mxu0
    %v466 = vadd.f32 0.0, %v465
    %v467 = vpop.f32.mrb[0].mxu0
    %468 = vdwg.mxu0
    %v470 = vsel %vm347, %v369, 0
    %v473 = vsel %vm347, %v371, 0
    %475 = vmatprep.subr.mxu0 0.0
    %476 = vmatpush1.msra.mxu0 %v137
    %477 = vmatprep.subr.mxu0 0.0
    %478 = vmatpush1.msra.mxu0 %v142
    %479 = vmatprep.subr.mxu0 0.0
    %480 = vmatpush1.msra.mxu0 0.0
    %481 = vmatprep.subr.mxu0 0.0
    %482 = vmatpush1.msra.mxu0 0.0
    %483 = vmatprep.subr.mxu0 0.0
    %484 = vmatpush1.msra.mxu0 0.0
    %485 = vmatprep.subr.mxu0 0.0
    %486 = vmatpush1.msra.mxu0 0.0
    %487 = vmatprep.subr.mxu0 0.0
    %488 = vmatpush1.msra.mxu0 0.0
    %489 = vmatprep.subr.mxu0 0.0
    %490 = vmatpush1.msra.mxu0 0.0
    %491 = vmatprep.subr.mxu0 0.0
    %492 = vmatpush1.msra.mxu0 0.0
    %493 = vmatprep.subr.mxu0 0.0
    %494 = vmatpush1.msra.mxu0 0.0
    %495 = vmatprep.subr.mxu0 0.0
    %496 = vmatpush1.msra.mxu0 0.0
    %497 = vmatprep.subr.mxu0 0.0
    %498 = vmatpush1.msra.mxu0 0.0
    %499 = vmatprep.subr.mxu0 0.0
    %500 = vmatpush1.msra.mxu0 0.0
    %501 = vmatprep.subr.mxu0 0.0
    %502 = vmatpush1.msra.mxu0 0.0
    %503 = vmatprep.subr.mxu0 0.0
    %504 = vmatpush1.msra.mxu0 0.0
    %505 = vmatprep.subr.mxu0 0.0
    %506 = vmatpush1.msra.mxu0 0.0
    %507 = vmatprep.subr.mxu0 0.0
    %508 = vmatpush1.msra.mxu0 0.0
    %509 = vmatprep.subr.mxu0 0.0
    %510 = vmatpush1.msra.mxu0 0.0
    %511 = vmatprep.subr.mxu0 0.0
    %512 = vmatpush1.msra.mxu0 0.0
    %513 = vmatprep.subr.mxu0 0.0
    %514 = vmatpush1.msra.mxu0 0.0
    %515 = vmatprep.subr.mxu0 0.0
    %516 = vmatpush1.msra.mxu0 0.0
    %517 = vmatprep.subr.mxu0 0.0
    %518 = vmatpush1.msra.mxu0 0.0
    %519 = vmatprep.subr.mxu0 0.0
    %520 = vmatpush1.msra.mxu0 0.0
    %521 = vmatprep.subr.mxu0 0.0
    %522 = vmatpush1.msra.mxu0 0.0
    %523 = vmatprep.subr.mxu0 0.0
    %524 = vmatpush1.msra.mxu0 0.0
    %525 = vmatprep.subr.mxu0 0.0
    %526 = vmatpush1.msra.mxu0 0.0
    %527 = vmatprep.subr.mxu0 0.0
    %528 = vmatpush1.msra.mxu0 0.0
    %529 = vmatprep.subr.mxu0 0.0
    %530 = vmatpush1.msra.mxu0 0.0
    %531 = vmatprep.subr.mxu0 0.0
    %532 = vmatpush1.msra.mxu0 0.0
    %533 = vmatprep.subr.mxu0 0.0
    %534 = vmatpush1.msra.mxu0 0.0
    %535 = vmatprep.subr.mxu0 0.0
    %536 = vmatpush1.msra.mxu0 0.0
    %537 = vmatprep.subr.mxu0 0.0
    %538 = vmatpush1.msra.mxu0 0.0
    %539 = vmatprep.mubr.f32.mxu0 0.0
    %540 = vmatmul.mubr.f32.gmra.mrb[0].mxu0 %v470
    %v541 = vpop.f32.mrb[0].mxu0
    %v542 = vadd.f32 0.0, %v541
    %v543 = vpop.f32.mrb[0].mxu0
    %544 = vmatprep.mubr.f32.mxu0 0.0
    %545 = vmatmul.mubr.f32.gmra.mrb[0].mxu0 %v473
    %v546 = vpop.f32.mrb[0].mxu0
    %v547 = vadd.f32 0.0, %v546
    %v548 = vpop.f32.mrb[0].mxu0
    %549 = vdwg.mxu0
    %v550 = vmul.f32 %v461, %v384
    %v551 = vmul.f32 %v466, %v385
    %v552 = vmul.f32 %v542, %v386
    %v553 = vmul.f32 %v547, %v387
    %554 = vst [vmem:[#allocation7] sm:$0xff] %v550
    %555 = vst [vmem:[#allocation7 + $0x8] sm:$0xff] %v551
    %556 = vst [vmem:[#allocation7 + $0x10] sm:$0xff] %v552
    %557 = vst [vmem:[#allocation7 + $0x18] sm:$0xff] %v553
    // Predicated region
    $region18: #{tpu_custom_call.1} parent=1 // pred_check
      _
    $region19: #{tpu_custom_call.1} parent=1 // pred_check_branch
      %559 = sbr.rel (0) target = $region21
    $region20: #{tpu_custom_call.1} parent=1 // pred_region
      %s561 = ssub.s32 512, 512
      %562 = vsyncadd [#allocation4], %s561
      %s563 = sshll.u32 [#allocation7], 4
      %s564 = int_to_ptr.vmem [resolvable:$true] %s563
      %569 = dma.vmem_to_hbm [thread:$0]  %s564, 512, %s2, [#allocation4], 128, 128, 8
    $region21: #{tpu_custom_call.1} parent=1 // pred_fallthru
      _
    // Predicated region
    $region22: #{tpu_custom_call.1} parent=1 // pred_check
      _
    $region23: #{tpu_custom_call.1} parent=1 // pred_check_branch
      %571 = sbr.rel (0) target = $region25
    $region24: #{tpu_custom_call.1} parent=1 // pred_region
      %572 = dma.done [#allocation4], 512
    $region25: #{tpu_custom_call.1} parent=1 // pred_fallthru
      _
    %573 = vsyncpa [#allocation3], 1
    %574 = vsyncpa [#allocation6], 1
    %575 = vsyncpa [#allocation4], 1

</llo_original>
